<compile_context>
chip_gen: v6e
topology: v6e:2x2x1
jax: 0.10.0
libtpu: 0.0.40
codegen_flags: <defaults>
</compile_context>

<pallas_src>
import functools

import jax
import jax.numpy as jnp
from jax.experimental import pallas as pl
from jax.experimental.pallas import tpu as pltpu

_LANE = 128          # TPU lane width: feature dims padded to multiples of this
_BF16_SUBLANE = 16   # bf16 packs 16 rows per sublane -> batch tile multiple of 16
_X_TILE_VMEM_BUDGET = 8 * 1024 * 1024  # per-buffer budget for the streamed x tile


def _round_up(n, m):
    return ((n + m - 1) // m) * m


def _pick_batch_tile(batch, flat_dim, max_tile):
    """Pick a batch tile (multiple of 16 for bf16 sublane packing).

    * cap so that one double-buffered x tile (tile x flat_dim bf16) stays
      within a fixed VMEM budget regardless of input_size,
    * for large batches aim for >= 2 grid steps so v7x's two TensorCores both
      get work under dimension_semantics=('parallel',).
    """
    vmem_cap = max(_BF16_SUBLANE,
                   (_X_TILE_VMEM_BUDGET // max(flat_dim * 2, 1))
                   // _BF16_SUBLANE * _BF16_SUBLANE)
    cap = min(max_tile, vmem_cap)
    if batch <= 2 * _BF16_SUBLANE:
        return min(cap, _round_up(max(batch, 1), _BF16_SUBLANE))
    half = -(-batch // 2)
    return min(cap, _round_up(half, _BF16_SUBLANE))


# ----------------------------------------------------------------------------
# Pallas kernel: fused 3-layer MLP (Linear+ReLU, Linear+ReLU, Linear)
# ----------------------------------------------------------------------------
def _mlp_kernel(x_ref, w1_ref, b1_ref, w2_ref, b2_ref, w3_ref, b3_ref, o_ref):
    # Layer 1 (dominant FLOPs & bytes): bf16 x @ bf16 w1, f32 accumulation.
    h = jnp.dot(x_ref[...], w1_ref[...], preferred_element_type=jnp.float32)
    h = jnp.maximum(h + b1_ref[...], 0.0)
    # Layers 2 & 3 are tiny (<= a few 128x128 tiles); keep them in f32.
    h = jnp.dot(h, w2_ref[...], preferred_element_type=jnp.float32)
    h = jnp.maximum(h + b2_ref[...], 0.0)
    out = jnp.dot(h, w3_ref[...], preferred_element_type=jnp.float32) + b3_ref[...]
    o_ref[...] = out.astype(o_ref.dtype)


@functools.partial(jax.jit, static_argnames=("max_batch_tile",))
def meta_cl_mlp_forward(x, params, *, max_batch_tile=512):
    """x: (B, C, H, W) float32 NCHW.  params: dict of transposed weights/biases."""
    w1, b1 = params["w1"], params["b1"]
    w2, b2 = params["w2"], params["b2"]
    w3, b3 = params["w3"], params["b3"]

    B = x.shape[0]
    D = w1.shape[0]
    H1, H2, C = w1.shape[1], w2.shape[1], w3.shape[1]
    H1p, H2p, Cp = _round_up(H1, _LANE), _round_up(H2, _LANE), _round_up(C, _LANE)

    # Flatten NCHW row-major (== nn.Flatten); cast the big streamed operand to
    # bf16 (halves HBM->VMEM bytes; MXU accumulates in f32 inside the kernel).
    x_flat = x.reshape(B, -1).astype(jnp.bfloat16)

    # Batch tiling: pad rows to a multiple of the tile so every block
    # (including the output writeback) is full-size and unmasked.
    tile = _pick_batch_tile(B, D, max_batch_tile)
    Bp = _round_up(B, tile)
    if Bp != B:
        x_flat = jnp.pad(x_flat, ((0, Bp - B), (0, 0)))
    grid = (Bp // tile,)

    # Zero-pad weights/biases so hidden + output dims are lane-dense (128).
    # Zero padding is numerically exact: padded columns stay 0 through +bias
    # (also 0) and ReLU, and padded rows only multiply those zeros.
    w1p = jnp.zeros((D, H1p), jnp.bfloat16).at[:, :H1].set(w1.astype(jnp.bfloat16))
    b1p = jnp.zeros((1, H1p), jnp.float32).at[:, :H1].set(b1)
    w2p = jnp.zeros((H1p, H2p), jnp.float32).at[:H1, :H2].set(w2)
    b2p = jnp.zeros((1, H2p), jnp.float32).at[:, :H2].set(b2)
    w3p = jnp.zeros((H2p, Cp), jnp.float32).at[:H2, :C].set(w3)
    b3p = jnp.zeros((1, Cp), jnp.float32).at[:, :C].set(b3)

    flops = 2 * Bp * (D * H1p + H1p * H2p + H2p * Cp)
    bytes_accessed = (
        x_flat.size * 2 + w1p.size * 2
        + (w2p.size + w3p.size + b1p.size + b2p.size + b3p.size) * 4
        + Bp * Cp * 4)

    out_padded = pl.pallas_call(
        _mlp_kernel,
        out_shape=jax.ShapeDtypeStruct((Bp, Cp), jnp.float32),
        grid_spec=pltpu.PrefetchScalarGridSpec(
            num_scalar_prefetch=0,
            grid=grid,
            in_specs=[
                pl.BlockSpec((tile, D), lambda i: (i, 0)),    # x tile (bf16)
                # Weights/biases are grid-invariant and small; default
                # double-buffering costs only a few hundred KiB of VMEM.
                pl.BlockSpec((D, H1p), lambda i: (0, 0)),     # w1 (bf16)
                pl.BlockSpec((1, H1p), lambda i: (0, 0)),     # b1 (f32)
                pl.BlockSpec((H1p, H2p), lambda i: (0, 0)),   # w2 (f32)
                pl.BlockSpec((1, H2p), lambda i: (0, 0)),     # b2 (f32)
                pl.BlockSpec((H2p, Cp), lambda i: (0, 0)),    # w3 (f32)
                pl.BlockSpec((1, Cp), lambda i: (0, 0)),      # b3 (f32)
            ],
            out_specs=pl.BlockSpec((tile, Cp), lambda i: (i, 0)),  # lane-dense
        ),
        compiler_params=pltpu.CompilerParams(
            dimension_semantics=("parallel",),
            vmem_limit_bytes=64 * 1024 * 1024,
        ),
        cost_estimate=pl.CostEstimate(
            flops=flops, transcendentals=0, bytes_accessed=bytes_accessed),
    )(x_flat, w1p, b1p, w2p, b2p, w3p, b3p)

    return out_padded[:B, :C]


# ----------------------------------------------------------------------------
# Deterministic parameter init (mirrors nn.Linear shapes; synthetic weights)
# ----------------------------------------------------------------------------
def init_params(key, input_size, num_classes, hidden_sizes=(32, 32)):
    d_in = 1
    for s in input_size:
        d_in *= s
    dims = [d_in, hidden_sizes[0], hidden_sizes[1], num_classes]
    params = {}
    names = [("w1", "b1"), ("w2", "b2"), ("w3", "b3")]
    for idx, (wn, bn) in enumerate(names):
        key, kw, kb = jax.random.split(key, 3)
        fan_in, fan_out = dims[idx], dims[idx + 1]
        bound = 1.0 / (fan_in ** 0.5)  # PyTorch default Linear init range
        # Stored already transposed to (in, out) for x @ W layout.
        params[wn] = jax.random.uniform(
            kw, (fan_in, fan_out), jnp.float32, -bound, bound)
        params[bn] = jax.random.uniform(
            kb, (1, fan_out), jnp.float32, -bound, bound)
    return params


def reference_forward(x, params):
    """Pure-JAX reference mimicking the kernel's precision policy:
    x and w1 rounded to bf16 (f32 accumulation), everything else f32."""
    h = x.reshape(x.shape[0], -1)
    h = h.astype(jnp.bfloat16).astype(jnp.float32)
    w1 = params["w1"].astype(jnp.bfloat16).astype(jnp.float32)
    h = jnp.maximum(h @ w1 + params["b1"], 0.0)
    h = jnp.maximum(h @ params["w2"] + params["b2"], 0.0)
    return h @ params["w3"] + params["b3"]


if __name__ == "__main__":
    key = jax.random.PRNGKey(0)
    kx, kp = jax.random.split(key)

    # Small shapes consistent with the module: input_size=(4,16,16), 8 classes.
    B, C, H, W = 2, 4, 16, 16
    num_classes = 8
    x = jax.random.normal(kx, (B, C, H, W), jnp.float32)

    params = init_params(kp, (C, H, W), num_classes, hidden_sizes=(32, 32))

    out = meta_cl_mlp_forward(x, params)
    out = jax.block_until_ready(out)

    ref = reference_forward(x, params)
    assert out.shape == (B, num_classes), out.shape
    assert jnp.allclose(out, ref, atol=1e-2, rtol=1e-2), "mismatch vs JAX reference"

    print("KERNEL_OK")
</pallas_src>

<mosaic_0001>
module attributes {stable_mosaic.version = 11 : i64} {
  func.func @_mlp_kernel(%arg0: i32, %arg1: memref<16x1024xbf16, #tpu.memory_space<vmem>>, %arg2: memref<1024x128xbf16, #tpu.memory_space<vmem>>, %arg3: memref<1x128xf32, #tpu.memory_space<vmem>>, %arg4: memref<128x128xf32, #tpu.memory_space<vmem>>, %arg5: memref<1x128xf32, #tpu.memory_space<vmem>>, %arg6: memref<128x128xf32, #tpu.memory_space<vmem>>, %arg7: memref<1x128xf32, #tpu.memory_space<vmem>>, %arg8: memref<16x128xf32, #tpu.memory_space<vmem>>) attributes {dimension_semantics = [#tpu.dimension_semantics<parallel>], iteration_bounds = array<i64: 1>, scalar_prefetch = 0 : i64, scratch_operands = 0 : i64, tpu.core_type = #tpu.core_type<tc>, window_params = [{transform_indices = @transform_0, window_bounds = array<i64: 16, 1024>}, {pipeline_mode = #tpu.pipeline_mode<synchronous>, transform_indices = @transform_1, window_bounds = array<i64: 1024, 128>}, {pipeline_mode = #tpu.pipeline_mode<synchronous>, transform_indices = @transform_2, window_bounds = array<i64: 1, 128>}, {pipeline_mode = #tpu.pipeline_mode<synchronous>, transform_indices = @transform_3, window_bounds = array<i64: 128, 128>}, {pipeline_mode = #tpu.pipeline_mode<synchronous>, transform_indices = @transform_4, window_bounds = array<i64: 1, 128>}, {pipeline_mode = #tpu.pipeline_mode<synchronous>, transform_indices = @transform_5, window_bounds = array<i64: 128, 128>}, {pipeline_mode = #tpu.pipeline_mode<synchronous>, transform_indices = @transform_6, window_bounds = array<i64: 1, 128>}, {transform_indices = @transform_7, window_bounds = array<i64: 16, 128>}]} {
    %c0 = arith.constant 0 : index
    %c0_0 = arith.constant 0 : index
    %0 = vector.load %arg1[%c0, %c0_0] : memref<16x1024xbf16, #tpu.memory_space<vmem>>, vector<16x1024xbf16>
    %c0_1 = arith.constant 0 : index
    %c0_2 = arith.constant 0 : index
    %1 = vector.load %arg2[%c0_1, %c0_2] : memref<1024x128xbf16, #tpu.memory_space<vmem>>, vector<1024x128xbf16>
    %cst = arith.constant dense<0.000000e+00> : vector<16x128xf32>
    %2 = tpu.matmul %0, %1, %cst {dimension_numbers = #tpu.dot_dimension_numbers<[1], [0], [0], [1], [0, 0, 1, 1], [], []>} : vector<16x1024xbf16>, vector<1024x128xbf16>, vector<16x128xf32> -> vector<16x128xf32>
    %c0_3 = arith.constant 0 : index
    %c0_4 = arith.constant 0 : index
    %3 = vector.load %arg3[%c0_3, %c0_4] : memref<1x128xf32, #tpu.memory_space<vmem>>, vector<1x128xf32>
    %4 = vector.broadcast %3 : vector<1x128xf32> to vector<16x128xf32>
    %5 = arith.addf %2, %4 : vector<16x128xf32>
    %cst_5 = arith.constant 0.000000e+00 : f32
    %6 = vector.broadcast %cst_5 : f32 to vector<16x128xf32>
    %7 = arith.maximumf %5, %6 : vector<16x128xf32>
    %c0_6 = arith.constant 0 : index
    %c0_7 = arith.constant 0 : index
    %8 = vector.load %arg4[%c0_6, %c0_7] : memref<128x128xf32, #tpu.memory_space<vmem>>, vector<128x128xf32>
    %cst_8 = arith.constant dense<0.000000e+00> : vector<16x128xf32>
    %9 = tpu.matmul %7, %8, %cst_8 {dimension_numbers = #tpu.dot_dimension_numbers<[1], [0], [0], [1], [0, 0, 1, 1], [], []>} : vector<16x128xf32>, vector<128x128xf32>, vector<16x128xf32> -> vector<16x128xf32>
    %c0_9 = arith.constant 0 : index
    %c0_10 = arith.constant 0 : index
    %10 = vector.load %arg5[%c0_9, %c0_10] : memref<1x128xf32, #tpu.memory_space<vmem>>, vector<1x128xf32>
    %11 = vector.broadcast %10 : vector<1x128xf32> to vector<16x128xf32>
    %12 = arith.addf %9, %11 : vector<16x128xf32>
    %cst_11 = arith.constant 0.000000e+00 : f32
    %13 = vector.broadcast %cst_11 : f32 to vector<16x128xf32>
    %14 = arith.maximumf %12, %13 : vector<16x128xf32>
    %c0_12 = arith.constant 0 : index
    %c0_13 = arith.constant 0 : index
    %15 = vector.load %arg6[%c0_12, %c0_13] : memref<128x128xf32, #tpu.memory_space<vmem>>, vector<128x128xf32>
    %cst_14 = arith.constant dense<0.000000e+00> : vector<16x128xf32>
    %16 = tpu.matmul %14, %15, %cst_14 {dimension_numbers = #tpu.dot_dimension_numbers<[1], [0], [0], [1], [0, 0, 1, 1], [], []>} : vector<16x128xf32>, vector<128x128xf32>, vector<16x128xf32> -> vector<16x128xf32>
    %c0_15 = arith.constant 0 : index
    %c0_16 = arith.constant 0 : index
    %17 = vector.load %arg7[%c0_15, %c0_16] : memref<1x128xf32, #tpu.memory_space<vmem>>, vector<1x128xf32>
    %18 = vector.broadcast %17 : vector<1x128xf32> to vector<16x128xf32>
    %19 = arith.addf %16, %18 : vector<16x128xf32>
    %c0_17 = arith.constant 0 : index
    %c0_18 = arith.constant 0 : index
    %20 = vector.load %arg8[%c0_17, %c0_18] : memref<16x128xf32, #tpu.memory_space<vmem>>, vector<16x128xf32>
    tpu.vector_store %arg8[%c0_17, %c0_18], %19 {strides = array<i32>} : memref<16x128xf32, #tpu.memory_space<vmem>>, vector<16x128xf32>,
    return
  }
  func.func @transform_0(%arg0: i32) -> (i32, i32) {
    %c0_i32 = arith.constant 0 : i32
    %c0_i32_0 = arith.constant 0 : i32
    return %arg0, %c0_i32 : i32, i32
  }
  func.func @transform_1(%arg0: i32) -> (i32, i32) {
    %c0_i32 = arith.constant 0 : i32
    %c0_i32_0 = arith.constant 0 : i32
    %c0_i32_1 = arith.constant 0 : i32
    return %c0_i32, %c0_i32_0 : i32, i32
  }
  func.func @transform_2(%arg0: i32) -> (i32, i32) {
    %c0_i32 = arith.constant 0 : i32
    %c0_i32_0 = arith.constant 0 : i32
    %c0_i32_1 = arith.constant 0 : i32
    return %c0_i32, %c0_i32_0 : i32, i32
  }
  func.func @transform_3(%arg0: i32) -> (i32, i32) {
    %c0_i32 = arith.constant 0 : i32
    %c0_i32_0 = arith.constant 0 : i32
    %c0_i32_1 = arith.constant 0 : i32
    return %c0_i32, %c0_i32_0 : i32, i32
  }
  func.func @transform_4(%arg0: i32) -> (i32, i32) {
    %c0_i32 = arith.constant 0 : i32
    %c0_i32_0 = arith.constant 0 : i32
    %c0_i32_1 = arith.constant 0 : i32
    return %c0_i32, %c0_i32_0 : i32, i32
  }
  func.func @transform_5(%arg0: i32) -> (i32, i32) {
    %c0_i32 = arith.constant 0 : i32
    %c0_i32_0 = arith.constant 0 : i32
    %c0_i32_1 = arith.constant 0 : i32
    return %c0_i32, %c0_i32_0 : i32, i32
  }
  func.func @transform_6(%arg0: i32) -> (i32, i32) {
    %c0_i32 = arith.constant 0 : i32
    %c0_i32_0 = arith.constant 0 : i32
    %c0_i32_1 = arith.constant 0 : i32
    return %c0_i32, %c0_i32_0 : i32, i32
  }
  func.func @transform_7(%arg0: i32) -> (i32, i32) {
    %c0_i32 = arith.constant 0 : i32
    %c0_i32_0 = arith.constant 0 : i32
    return %arg0, %c0_i32 : i32, i32
  }
}

</mosaic_0001>

<llo_original>
// kernel: meta_cl_mlp_forward.1
$region0: #{meta_cl_mlp_forward.1}
  #allocation0 [shape = 'u32[]', space=smem, size = 0x4, offset = 0x4, fixed_abs, tag = 'smem constant byte address 0x4 - core index']
  #allocation1 [shape = 'u32[144,128]{1,0:T(1,128)}', space=vmem, size = 0x12000, scoped, tag = 'internal scratch']
  %s0 = inlined_call_operand.vmem [shape: bf16[16,1024], index: 0, kind: input, shape index: {}]
  %s1 = inlined_call_operand.vmem [shape: bf16[1024,128], index: 1, kind: input, shape index: {}]
  %s2 = inlined_call_operand.vmem [shape: f32[1,128], index: 2, kind: input, shape index: {}]
  %s3 = inlined_call_operand.vmem [shape: f32[128,128], index: 3, kind: input, shape index: {}]
  %s4 = inlined_call_operand.vmem [shape: f32[1,128], index: 4, kind: input, shape index: {}]
  %s5 = inlined_call_operand.vmem [shape: f32[128,128], index: 5, kind: input, shape index: {}]
  %s6 = inlined_call_operand.vmem [shape: f32[1,128], index: 6, kind: input, shape index: {}]
  %s7 = inlined_call_operand.vmem [shape: f32[16,128], index: 7, kind: output, shape index: {}]
  %s8 = sld [smem:[#allocation0]]
  $region38: #{meta_cl_mlp_forward.1} parent=0
    _
  %s10 = ssub.s32 1, %s8
  %s11 = scalar_select 0, %s10, %s8
  // Predicated region
  $region2: #{meta_cl_mlp_forward.1} parent=0 // pred_check
    _
  $region3: #{meta_cl_mlp_forward.1} parent=0 // pred_check_branch
    %13 = sbr.rel (0) target = $region5
  $region4: #{meta_cl_mlp_forward.1} parent=0 // pred_region
    _
  $region5: #{meta_cl_mlp_forward.1} parent=0 // pred_fallthru
    _
  // Predicated region
  $region6: #{meta_cl_mlp_forward.1} parent=0 // pred_check
    _
  $region7: #{meta_cl_mlp_forward.1} parent=0 // pred_check_branch
    %15 = sbr.rel (0) target = $region9
  $region8: #{meta_cl_mlp_forward.1} parent=0 // pred_region
    _
  $region9: #{meta_cl_mlp_forward.1} parent=0 // pred_fallthru
    _
  // Predicated region
  $region10: #{meta_cl_mlp_forward.1} parent=0 // pred_check
    _
  $region11: #{meta_cl_mlp_forward.1} parent=0 // pred_check_branch
    %17 = sbr.rel (0) target = $region13
  $region12: #{meta_cl_mlp_forward.1} parent=0 // pred_region
    _
  $region13: #{meta_cl_mlp_forward.1} parent=0 // pred_fallthru
    _
  // Predicated region
  $region14: #{meta_cl_mlp_forward.1} parent=0 // pred_check
    _
  $region15: #{meta_cl_mlp_forward.1} parent=0 // pred_check_branch
    %19 = sbr.rel (0) target = $region17
  $region16: #{meta_cl_mlp_forward.1} parent=0 // pred_region
    _
  $region17: #{meta_cl_mlp_forward.1} parent=0 // pred_fallthru
    _
  // Predicated region
  $region18: #{meta_cl_mlp_forward.1} parent=0 // pred_check
    _
  $region19: #{meta_cl_mlp_forward.1} parent=0 // pred_check_branch
    %21 = sbr.rel (0) target = $region21
  $region20: #{meta_cl_mlp_forward.1} parent=0 // pred_region
    _
  $region21: #{meta_cl_mlp_forward.1} parent=0 // pred_fallthru
    _
  // Predicated region
  $region22: #{meta_cl_mlp_forward.1} parent=0 // pred_check
    _
  $region23: #{meta_cl_mlp_forward.1} parent=0 // pred_check_branch
    %23 = sbr.rel (0) target = $region25
  $region24: #{meta_cl_mlp_forward.1} parent=0 // pred_region
    _
  $region25: #{meta_cl_mlp_forward.1} parent=0 // pred_fallthru
    _
  // Predicated region
  $region26: #{meta_cl_mlp_forward.1} parent=0 // pred_check
    _
  $region27: #{meta_cl_mlp_forward.1} parent=0 // pred_check_branch
    %25 = sbr.rel (0) target = $region29
  $region28: #{meta_cl_mlp_forward.1} parent=0 // pred_region
    _
  $region29: #{meta_cl_mlp_forward.1} parent=0 // pred_fallthru
    _
  %v27 = vld [vmem:[%s0] sm:$0xff]
  %v28 = vld [vmem:[%s0 + $0x8] sm:$0xff]
  %v29 = vld [vmem:[%s0 + $0x10] sm:$0xff]
  %v30 = vld [vmem:[%s0 + $0x18] sm:$0xff]
  %v31 = vld [vmem:[%s0 + $0x20] sm:$0xff]
  %v32 = vld [vmem:[%s0 + $0x28] sm:$0xff]
  %v33 = vld [vmem:[%s0 + $0x30] sm:$0xff]
  %v34 = vld [vmem:[%s0 + $0x38] sm:$0xff]
  %v35 = vld [vmem:[%s1] sm:$0xf]
  %v36 = vld [vmem:[%s1 + $0x4] sm:$0xf]
  %v37 = vld [vmem:[%s1 + $0x8] sm:$0xf]
  %v38 = vld [vmem:[%s1 + $0xc] sm:$0xf]
  %v39 = vld [vmem:[%s1 + $0x10] sm:$0xf]
  %v40 = vld [vmem:[%s1 + $0x14] sm:$0xf]
  %v41 = vld [vmem:[%s1 + $0x18] sm:$0xf]
  %v42 = vld [vmem:[%s1 + $0x1c] sm:$0xf]
  %v43 = vld [vmem:[%s1 + $0x20] sm:$0xf]
  %v44 = vld [vmem:[%s1 + $0x24] sm:$0xf]
  %v45 = vld [vmem:[%s1 + $0x28] sm:$0xf]
  %v46 = vld [vmem:[%s1 + $0x2c] sm:$0xf]
  %v47 = vld [vmem:[%s1 + $0x30] sm:$0xf]
  %v48 = vld [vmem:[%s1 + $0x34] sm:$0xf]
  %v49 = vld [vmem:[%s1 + $0x38] sm:$0xf]
  %v50 = vld [vmem:[%s1 + $0x3c] sm:$0xf]
  %v51 = vld [vmem:[%s1 + $0x40] sm:$0xf]
  %v52 = vld [vmem:[%s1 + $0x44] sm:$0xf]
  %v53 = vld [vmem:[%s1 + $0x48] sm:$0xf]
  %v54 = vld [vmem:[%s1 + $0x4c] sm:$0xf]
  %v55 = vld [vmem:[%s1 + $0x50] sm:$0xf]
  %v56 = vld [vmem:[%s1 + $0x54] sm:$0xf]
  %v57 = vld [vmem:[%s1 + $0x58] sm:$0xf]
  %v58 = vld [vmem:[%s1 + $0x5c] sm:$0xf]
  %v59 = vld [vmem:[%s1 + $0x60] sm:$0xf]
  %v60 = vld [vmem:[%s1 + $0x64] sm:$0xf]
  %v61 = vld [vmem:[%s1 + $0x68] sm:$0xf]
  %v62 = vld [vmem:[%s1 + $0x6c] sm:$0xf]
  %v63 = vld [vmem:[%s1 + $0x70] sm:$0xf]
  %v64 = vld [vmem:[%s1 + $0x74] sm:$0xf]
  %v65 = vld [vmem:[%s1 + $0x78] sm:$0xf]
  %v66 = vld [vmem:[%s1 + $0x7c] sm:$0xf]
  %v67 = vld [vmem:[%s1 + $0x80] sm:$0xf]
  %v68 = vld [vmem:[%s1 + $0x84] sm:$0xf]
  %v69 = vld [vmem:[%s1 + $0x88] sm:$0xf]
  %v70 = vld [vmem:[%s1 + $0x8c] sm:$0xf]
  %v71 = vld [vmem:[%s1 + $0x90] sm:$0xf]
  %v72 = vld [vmem:[%s1 + $0x94] sm:$0xf]
  %v73 = vld [vmem:[%s1 + $0x98] sm:$0xf]
  %v74 = vld [vmem:[%s1 + $0x9c] sm:$0xf]
  %v75 = vld [vmem:[%s1 + $0xa0] sm:$0xf]
  %v76 = vld [vmem:[%s1 + $0xa4] sm:$0xf]
  %v77 = vld [vmem:[%s1 + $0xa8] sm:$0xf]
  %v78 = vld [vmem:[%s1 + $0xac] sm:$0xf]
  %v79 = vld [vmem:[%s1 + $0xb0] sm:$0xf]
  %v80 = vld [vmem:[%s1 + $0xb4] sm:$0xf]
  %v81 = vld [vmem:[%s1 + $0xb8] sm:$0xf]
  %v82 = vld [vmem:[%s1 + $0xbc] sm:$0xf]
  %v83 = vld [vmem:[%s1 + $0xc0] sm:$0xf]
  %v84 = vld [vmem:[%s1 + $0xc4] sm:$0xf]
  %v85 = vld [vmem:[%s1 + $0xc8] sm:$0xf]
  %v86 = vld [vmem:[%s1 + $0xcc] sm:$0xf]
  %v87 = vld [vmem:[%s1 + $0xd0] sm:$0xf]
  %v88 = vld [vmem:[%s1 + $0xd4] sm:$0xf]
  %v89 = vld [vmem:[%s1 + $0xd8] sm:$0xf]
  %v90 = vld [vmem:[%s1 + $0xdc] sm:$0xf]
  %v91 = vld [vmem:[%s1 + $0xe0] sm:$0xf]
  %v92 = vld [vmem:[%s1 + $0xe4] sm:$0xf]
  %v93 = vld [vmem:[%s1 + $0xe8] sm:$0xf]
  %v94 = vld [vmem:[%s1 + $0xec] sm:$0xf]
  %v95 = vld [vmem:[%s1 + $0xf0] sm:$0xf]
  %v96 = vld [vmem:[%s1 + $0xf4] sm:$0xf]
  %v97 = vld [vmem:[%s1 + $0xf8] sm:$0xf]
  %v98 = vld [vmem:[%s1 + $0xfc] sm:$0xf]
  %v99 = vld [vmem:[%s1 + $0x100] sm:$0xf]
  %v100 = vld [vmem:[%s1 + $0x104] sm:$0xf]
  %v101 = vld [vmem:[%s1 + $0x108] sm:$0xf]
  %v102 = vld [vmem:[%s1 + $0x10c] sm:$0xf]
  %v103 = vld [vmem:[%s1 + $0x110] sm:$0xf]
  %v104 = vld [vmem:[%s1 + $0x114] sm:$0xf]
  %v105 = vld [vmem:[%s1 + $0x118] sm:$0xf]
  %v106 = vld [vmem:[%s1 + $0x11c] sm:$0xf]
  %v107 = vld [vmem:[%s1 + $0x120] sm:$0xf]
  %v108 = vld [vmem:[%s1 + $0x124] sm:$0xf]
  %v109 = vld [vmem:[%s1 + $0x128] sm:$0xf]
  %v110 = vld [vmem:[%s1 + $0x12c] sm:$0xf]
  %v111 = vld [vmem:[%s1 + $0x130] sm:$0xf]
  %v112 = vld [vmem:[%s1 + $0x134] sm:$0xf]
  %v113 = vld [vmem:[%s1 + $0x138] sm:$0xf]
  %v114 = vld [vmem:[%s1 + $0x13c] sm:$0xf]
  %v115 = vld [vmem:[%s1 + $0x140] sm:$0xf]
  %v116 = vld [vmem:[%s1 + $0x144] sm:$0xf]
  %v117 = vld [vmem:[%s1 + $0x148] sm:$0xf]
  %v118 = vld [vmem:[%s1 + $0x14c] sm:$0xf]
  %v119 = vld [vmem:[%s1 + $0x150] sm:$0xf]
  %v120 = vld [vmem:[%s1 + $0x154] sm:$0xf]
  %v121 = vld [vmem:[%s1 + $0x158] sm:$0xf]
  %v122 = vld [vmem:[%s1 + $0x15c] sm:$0xf]
  %v123 = vld [vmem:[%s1 + $0x160] sm:$0xf]
  %v124 = vld [vmem:[%s1 + $0x164] sm:$0xf]
  %v125 = vld [vmem:[%s1 + $0x168] sm:$0xf]
  %v126 = vld [vmem:[%s1 + $0x16c] sm:$0xf]
  %v127 = vld [vmem:[%s1 + $0x170] sm:$0xf]
  %v128 = vld [vmem:[%s1 + $0x174] sm:$0xf]
  %v129 = vld [vmem:[%s1 + $0x178] sm:$0xf]
  %v130 = vld [vmem:[%s1 + $0x17c] sm:$0xf]
  %v131 = vld [vmem:[%s1 + $0x180] sm:$0xf]
  %v132 = vld [vmem:[%s1 + $0x184] sm:$0xf]
  %v133 = vld [vmem:[%s1 + $0x188] sm:$0xf]
  %v134 = vld [vmem:[%s1 + $0x18c] sm:$0xf]
  %v135 = vld [vmem:[%s1 + $0x190] sm:$0xf]
  %v136 = vld [vmem:[%s1 + $0x194] sm:$0xf]
  %v137 = vld [vmem:[%s1 + $0x198] sm:$0xf]
  %v138 = vld [vmem:[%s1 + $0x19c] sm:$0xf]
  %v139 = vld [vmem:[%s1 + $0x1a0] sm:$0xf]
  %v140 = vld [vmem:[%s1 + $0x1a4] sm:$0xf]
  %v141 = vld [vmem:[%s1 + $0x1a8] sm:$0xf]
  %v142 = vld [vmem:[%s1 + $0x1ac] sm:$0xf]
  %v143 = vld [vmem:[%s1 + $0x1b0] sm:$0xf]
  %v144 = vld [vmem:[%s1 + $0x1b4] sm:$0xf]
  %v145 = vld [vmem:[%s1 + $0x1b8] sm:$0xf]
  %v146 = vld [vmem:[%s1 + $0x1bc] sm:$0xf]
  %v147 = vld [vmem:[%s1 + $0x1c0] sm:$0xf]
  %v148 = vld [vmem:[%s1 + $0x1c4] sm:$0xf]
  %v149 = vld [vmem:[%s1 + $0x1c8] sm:$0xf]
  %v150 = vld [vmem:[%s1 + $0x1cc] sm:$0xf]
  %v151 = vld [vmem:[%s1 + $0x1d0] sm:$0xf]
  %v152 = vld [vmem:[%s1 + $0x1d4] sm:$0xf]
  %v153 = vld [vmem:[%s1 + $0x1d8] sm:$0xf]
  %v154 = vld [vmem:[%s1 + $0x1dc] sm:$0xf]
  %v155 = vld [vmem:[%s1 + $0x1e0] sm:$0xf]
  %v156 = vld [vmem:[%s1 + $0x1e4] sm:$0xf]
  %v157 = vld [vmem:[%s1 + $0x1e8] sm:$0xf]
  %v158 = vld [vmem:[%s1 + $0x1ec] sm:$0xf]
  %v159 = vld [vmem:[%s1 + $0x1f0] sm:$0xf]
  %v160 = vld [vmem:[%s1 + $0x1f4] sm:$0xf]
  %v161 = vld [vmem:[%s1 + $0x1f8] sm:$0xf]
  %v162 = vld [vmem:[%s1 + $0x1fc] sm:$0xf]
  %v163 = vld [vmem:[%s2] sm:$0x1]
  %v165 = vlaneseq
  %v166 = vshrl.u32 %v165, 7
  %v167 = vsub.s32 0, %v166
  %v168 = vrot.slane %v163, %v167
  %v178 = vunpack.c.l.b16 %v27
  %v179 = vunpack.c.h.b16 %v27
  %v180 = vunpack.c.l.b16 %v28
  %v181 = vunpack.c.h.b16 %v28
  %v182 = vunpack.c.l.b16 %v29
  %v183 = vunpack.c.h.b16 %v29
  %v184 = vunpack.c.l.b16 %v30
  %v185 = vunpack.c.h.b16 %v30
  %v186 = vunpack.c.l.b16 %v31
  %v187 = vunpack.c.h.b16 %v31
  %v188 = vunpack.c.l.b16 %v32
  %v189 = vunpack.c.h.b16 %v32
  %v190 = vunpack.c.l.b16 %v33
  %v191 = vunpack.c.h.b16 %v33
  %v192 = vunpack.c.l.b16 %v34
  %v193 = vunpack.c.h.b16 %v34
  %v194 = vpack.c.b16 %v186, %v178
  %v195 = vpack.c.b16 %v187, %v179
  %v196 = vpack.c.b16 %v188, %v180
  %v197 = vpack.c.b16 %v189, %v181
  %v198 = vpack.c.b16 %v190, %v182
  %v199 = vpack.c.b16 %v191, %v183
  %v200 = vpack.c.b16 %v192, %v184
  %v201 = vpack.c.b16 %v193, %v185
  %v338 = vunpack.c.l.b16 %v35
  %v339 = vunpack.c.l.b16 %v36
  %v340 = vunpack.c.l.b16 %v37
  %v341 = vunpack.c.l.b16 %v38
  %v342 = vunpack.c.l.b16 %v39
  %v343 = vunpack.c.l.b16 %v40
  %v344 = vunpack.c.l.b16 %v41
  %v345 = vunpack.c.l.b16 %v42
  %v346 = vunpack.c.l.b16 %v43
  %v347 = vunpack.c.l.b16 %v44
  %v348 = vunpack.c.l.b16 %v45
  %v349 = vunpack.c.l.b16 %v46
  %v350 = vunpack.c.l.b16 %v47
  %v351 = vunpack.c.l.b16 %v48
  %v352 = vunpack.c.l.b16 %v49
  %v353 = vunpack.c.l.b16 %v50
  %v354 = vunpack.c.l.b16 %v51
  %v355 = vunpack.c.l.b16 %v52
  %v356 = vunpack.c.l.b16 %v53
  %v357 = vunpack.c.l.b16 %v54
  %v358 = vunpack.c.l.b16 %v55
  %v359 = vunpack.c.l.b16 %v56
  %v360 = vunpack.c.l.b16 %v57
  %v361 = vunpack.c.l.b16 %v58
  %v362 = vunpack.c.l.b16 %v59
  %v363 = vunpack.c.l.b16 %v60
  %v364 = vunpack.c.l.b16 %v61
  %v365 = vunpack.c.l.b16 %v62
  %v366 = vunpack.c.l.b16 %v63
  %v367 = vunpack.c.l.b16 %v64
  %v368 = vunpack.c.l.b16 %v65
  %v369 = vunpack.c.l.b16 %v66
  %v370 = vunpack.c.l.b16 %v67
  %v371 = vunpack.c.l.b16 %v68
  %v372 = vunpack.c.l.b16 %v69
  %v373 = vunpack.c.l.b16 %v70
  %v374 = vunpack.c.l.b16 %v71
  %v375 = vunpack.c.l.b16 %v72
  %v376 = vunpack.c.l.b16 %v73
  %v377 = vunpack.c.l.b16 %v74
  %v378 = vunpack.c.l.b16 %v75
  %v379 = vunpack.c.l.b16 %v76
  %v380 = vunpack.c.l.b16 %v77
  %v381 = vunpack.c.l.b16 %v78
  %v382 = vunpack.c.l.b16 %v79
  %v383 = vunpack.c.l.b16 %v80
  %v384 = vunpack.c.l.b16 %v81
  %v385 = vunpack.c.l.b16 %v82
  %v386 = vunpack.c.l.b16 %v83
  %v387 = vunpack.c.l.b16 %v84
  %v388 = vunpack.c.l.b16 %v85
  %v389 = vunpack.c.l.b16 %v86
  %v390 = vunpack.c.l.b16 %v87
  %v391 = vunpack.c.l.b16 %v88
  %v392 = vunpack.c.l.b16 %v89
  %v393 = vunpack.c.l.b16 %v90
  %v394 = vunpack.c.l.b16 %v91
  %v395 = vunpack.c.l.b16 %v92
  %v396 = vunpack.c.l.b16 %v93
  %v397 = vunpack.c.l.b16 %v94
  %v398 = vunpack.c.l.b16 %v95
  %v399 = vunpack.c.l.b16 %v96
  %v400 = vunpack.c.l.b16 %v97
  %v401 = vunpack.c.l.b16 %v98
  %v402 = vunpack.c.l.b16 %v99
  %v403 = vunpack.c.l.b16 %v100
  %v404 = vunpack.c.l.b16 %v101
  %v405 = vunpack.c.l.b16 %v102
  %v406 = vunpack.c.l.b16 %v103
  %v407 = vunpack.c.l.b16 %v104
  %v408 = vunpack.c.l.b16 %v105
  %v409 = vunpack.c.l.b16 %v106
  %v410 = vunpack.c.l.b16 %v107
  %v411 = vunpack.c.l.b16 %v108
  %v412 = vunpack.c.l.b16 %v109
  %v413 = vunpack.c.l.b16 %v110
  %v414 = vunpack.c.l.b16 %v111
  %v415 = vunpack.c.l.b16 %v112
  %v416 = vunpack.c.l.b16 %v113
  %v417 = vunpack.c.l.b16 %v114
  %v418 = vunpack.c.l.b16 %v115
  %v419 = vunpack.c.l.b16 %v116
  %v420 = vunpack.c.l.b16 %v117
  %v421 = vunpack.c.l.b16 %v118
  %v422 = vunpack.c.l.b16 %v119
  %v423 = vunpack.c.l.b16 %v120
  %v424 = vunpack.c.l.b16 %v121
  %v425 = vunpack.c.l.b16 %v122
  %v426 = vunpack.c.l.b16 %v123
  %v427 = vunpack.c.l.b16 %v124
  %v428 = vunpack.c.l.b16 %v125
  %v429 = vunpack.c.l.b16 %v126
  %v430 = vunpack.c.l.b16 %v127
  %v431 = vunpack.c.l.b16 %v128
  %v432 = vunpack.c.l.b16 %v129
  %v433 = vunpack.c.l.b16 %v130
  %v434 = vunpack.c.l.b16 %v131
  %v435 = vunpack.c.l.b16 %v132
  %v436 = vunpack.c.l.b16 %v133
  %v437 = vunpack.c.l.b16 %v134
  %v438 = vunpack.c.l.b16 %v135
  %v439 = vunpack.c.l.b16 %v136
  %v440 = vunpack.c.l.b16 %v137
  %v441 = vunpack.c.l.b16 %v138
  %v442 = vunpack.c.l.b16 %v139
  %v443 = vunpack.c.l.b16 %v140
  %v444 = vunpack.c.l.b16 %v141
  %v445 = vunpack.c.l.b16 %v142
  %v446 = vunpack.c.l.b16 %v143
  %v447 = vunpack.c.l.b16 %v144
  %v448 = vunpack.c.l.b16 %v145
  %v449 = vunpack.c.l.b16 %v146
  %v450 = vunpack.c.l.b16 %v147
  %v451 = vunpack.c.l.b16 %v148
  %v452 = vunpack.c.l.b16 %v149
  %v453 = vunpack.c.l.b16 %v150
  %v454 = vunpack.c.l.b16 %v151
  %v455 = vunpack.c.l.b16 %v152
  %v456 = vunpack.c.l.b16 %v153
  %v457 = vunpack.c.l.b16 %v154
  %v458 = vunpack.c.l.b16 %v155
  %v459 = vunpack.c.l.b16 %v156
  %v460 = vunpack.c.l.b16 %v157
  %v461 = vunpack.c.l.b16 %v158
  %v462 = vunpack.c.l.b16 %v159
  %v463 = vunpack.c.l.b16 %v160
  %v464 = vunpack.c.l.b16 %v161
  %v465 = vunpack.c.l.b16 %v162
  %v466 = vpack.c.b16 %v339, %v338
  %v467 = vpack.c.b16 %v341, %v340
  %v468 = vpack.c.b16 %v343, %v342
  %v469 = vpack.c.b16 %v345, %v344
  %v470 = vpack.c.b16 %v347, %v346
  %v471 = vpack.c.b16 %v349, %v348
  %v472 = vpack.c.b16 %v351, %v350
  %v473 = vpack.c.b16 %v353, %v352
  %v474 = vpack.c.b16 %v355, %v354
  %v475 = vpack.c.b16 %v357, %v356
  %v476 = vpack.c.b16 %v359, %v358
  %v477 = vpack.c.b16 %v361, %v360
  %v478 = vpack.c.b16 %v363, %v362
  %v479 = vpack.c.b16 %v365, %v364
  %v480 = vpack.c.b16 %v367, %v366
  %v481 = vpack.c.b16 %v369, %v368
  %v482 = vpack.c.b16 %v371, %v370
  %v483 = vpack.c.b16 %v373, %v372
  %v484 = vpack.c.b16 %v375, %v374
  %v485 = vpack.c.b16 %v377, %v376
  %v486 = vpack.c.b16 %v379, %v378
  %v487 = vpack.c.b16 %v381, %v380
  %v488 = vpack.c.b16 %v383, %v382
  %v489 = vpack.c.b16 %v385, %v384
  %v490 = vpack.c.b16 %v387, %v386
  %v491 = vpack.c.b16 %v389, %v388
  %v492 = vpack.c.b16 %v391, %v390
  %v493 = vpack.c.b16 %v393, %v392
  %v494 = vpack.c.b16 %v395, %v394
  %v495 = vpack.c.b16 %v397, %v396
  %v496 = vpack.c.b16 %v399, %v398
  %v497 = vpack.c.b16 %v401, %v400
  %v498 = vpack.c.b16 %v403, %v402
  %v499 = vpack.c.b16 %v405, %v404
  %v500 = vpack.c.b16 %v407, %v406
  %v501 = vpack.c.b16 %v409, %v408
  %v502 = vpack.c.b16 %v411, %v410
  %v503 = vpack.c.b16 %v413, %v412
  %v504 = vpack.c.b16 %v415, %v414
  %v505 = vpack.c.b16 %v417, %v416
  %v506 = vpack.c.b16 %v419, %v418
  %v507 = vpack.c.b16 %v421, %v420
  %v508 = vpack.c.b16 %v423, %v422
  %v509 = vpack.c.b16 %v425, %v424
  %v510 = vpack.c.b16 %v427, %v426
  %v511 = vpack.c.b16 %v429, %v428
  %v512 = vpack.c.b16 %v431, %v430
  %v513 = vpack.c.b16 %v433, %v432
  %v514 = vpack.c.b16 %v435, %v434
  %v515 = vpack.c.b16 %v437, %v436
  %v516 = vpack.c.b16 %v439, %v438
  %v517 = vpack.c.b16 %v441, %v440
  %v518 = vpack.c.b16 %v443, %v442
  %v519 = vpack.c.b16 %v445, %v444
  %v520 = vpack.c.b16 %v447, %v446
  %v521 = vpack.c.b16 %v449, %v448
  %v522 = vpack.c.b16 %v451, %v450
  %v523 = vpack.c.b16 %v453, %v452
  %v524 = vpack.c.b16 %v455, %v454
  %v525 = vpack.c.b16 %v457, %v456
  %v526 = vpack.c.b16 %v459, %v458
  %v527 = vpack.c.b16 %v461, %v460
  %v528 = vpack.c.b16 %v463, %v462
  %v529 = vpack.c.b16 %v465, %v464
  %594 = vmatprep.subr.bf16.mxu0 0
  %595 = vmatpush1.bf16.msra.mxu0 %v473
  %596 = vmatprep.subr.bf16.mxu0 0
  %597 = vmatpush1.bf16.msra.mxu0 %v472
  %598 = vmatprep.subr.bf16.mxu0 0
  %599 = vmatpush1.bf16.msra.mxu0 %v471
  %600 = vmatprep.subr.bf16.mxu0 0
  %601 = vmatpush1.bf16.msra.mxu0 %v470
  %602 = vmatprep.subr.bf16.mxu0 0
  %603 = vmatpush1.bf16.msra.mxu0 %v469
  %604 = vmatprep.subr.bf16.mxu0 0
  %605 = vmatpush1.bf16.msra.mxu0 %v468
  %606 = vmatprep.subr.bf16.mxu0 0
  %607 = vmatpush1.bf16.msra.mxu0 %v467
  %608 = vmatprep.subr.bf16.mxu0 0
  %609 = vmatpush1.bf16.msra.mxu0 %v466
  %610 = vmatprep.subr.bf16.mxu0 0
  %611 = vmatpush2.bf16.msra.mxu0 %v481
  %612 = vmatprep.subr.bf16.mxu0 0
  %613 = vmatpush2.bf16.msra.mxu0 %v480
  %614 = vmatprep.subr.bf16.mxu0 0
  %615 = vmatpush2.bf16.msra.mxu0 %v479
  %616 = vmatprep.subr.bf16.mxu0 0
  %617 = vmatpush2.bf16.msra.mxu0 %v478
  %618 = vmatprep.subr.bf16.mxu0 0
  %619 = vmatpush2.bf16.msra.mxu0 %v477
  %620 = vmatprep.subr.bf16.mxu0 0
  %621 = vmatpush2.bf16.msra.mxu0 %v476
  %622 = vmatprep.subr.bf16.mxu0 0
  %623 = vmatpush2.bf16.msra.mxu0 %v475
  %624 = vmatprep.subr.bf16.mxu0 0
  %625 = vmatpush2.bf16.msra.mxu0 %v474
  %626 = vmatprep.mubr.bf16.mxu0 %v195
  %627 = vmatmul.mubr.bf16.gmra.mxu0 %v194
  %v628 = vpop.f32.mrf.mxu0
  %v629 = vadd.f32 %v168, %v628
  %v630 = vpop.f32.mrf.mxu0
  %v631 = vpop.f32.mrf.mxu0
  %v632 = vadd.f32 %v168, %v631
  %v633 = vpop.f32.mrf.mxu0
  %634 = vdwg.mxu0
  %635 = vmatprep.subr.bf16.mxu0 0
  %636 = vmatpush1.bf16.msra.mxu0 %v489
  %637 = vmatprep.subr.bf16.mxu0 0
  %638 = vmatpush1.bf16.msra.mxu0 %v488
  %639 = vmatprep.subr.bf16.mxu0 0
  %640 = vmatpush1.bf16.msra.mxu0 %v487
  %641 = vmatprep.subr.bf16.mxu0 0
  %642 = vmatpush1.bf16.msra.mxu0 %v486
  %643 = vmatprep.subr.bf16.mxu0 0
  %644 = vmatpush1.bf16.msra.mxu0 %v485
  %645 = vmatprep.subr.bf16.mxu0 0
  %646 = vmatpush1.bf16.msra.mxu0 %v484
  %647 = vmatprep.subr.bf16.mxu0 0
  %648 = vmatpush1.bf16.msra.mxu0 %v483
  %649 = vmatprep.subr.bf16.mxu0 0
  %650 = vmatpush1.bf16.msra.mxu0 %v482
  %651 = vmatprep.subr.bf16.mxu0 0
  %652 = vmatpush2.bf16.msra.mxu0 %v497
  %653 = vmatprep.subr.bf16.mxu0 0
  %654 = vmatpush2.bf16.msra.mxu0 %v496
  %655 = vmatprep.subr.bf16.mxu0 0
  %656 = vmatpush2.bf16.msra.mxu0 %v495
  %657 = vmatprep.subr.bf16.mxu0 0
  %658 = vmatpush2.bf16.msra.mxu0 %v494
  %659 = vmatprep.subr.bf16.mxu0 0
  %660 = vmatpush2.bf16.msra.mxu0 %v493
  %661 = vmatprep.subr.bf16.mxu0 0
  %662 = vmatpush2.bf16.msra.mxu0 %v492
  %663 = vmatprep.subr.bf16.mxu0 0
  %664 = vmatpush2.bf16.msra.mxu0 %v491
  %665 = vmatprep.subr.bf16.mxu0 0
  %666 = vmatpush2.bf16.msra.mxu0 %v490
  %667 = vmatprep.mubr.bf16.mxu0 %v197
  %668 = vmatmul.mubr.bf16.gmra.mxu0 %v196
  %v669 = vpop.f32.mrf.mxu0
  %v670 = vadd.f32 %v629, %v669
  %v671 = vpop.f32.mrf.mxu0
  %v672 = vpop.f32.mrf.mxu0
  %v673 = vadd.f32 %v632, %v672
  %v674 = vpop.f32.mrf.mxu0
  %675 = vdwg.mxu0
  %676 = vmatprep.subr.bf16.mxu0 0
  %677 = vmatpush1.bf16.msra.mxu0 %v505
  %678 = vmatprep.subr.bf16.mxu0 0
  %679 = vmatpush1.bf16.msra.mxu0 %v504
  %680 = vmatprep.subr.bf16.mxu0 0
  %681 = vmatpush1.bf16.msra.mxu0 %v503
  %682 = vmatprep.subr.bf16.mxu0 0
  %683 = vmatpush1.bf16.msra.mxu0 %v502
  %684 = vmatprep.subr.bf16.mxu0 0
  %685 = vmatpush1.bf16.msra.mxu0 %v501
  %686 = vmatprep.subr.bf16.mxu0 0
  %687 = vmatpush1.bf16.msra.mxu0 %v500
  %688 = vmatprep.subr.bf16.mxu0 0
  %689 = vmatpush1.bf16.msra.mxu0 %v499
  %690 = vmatprep.subr.bf16.mxu0 0
  %691 = vmatpush1.bf16.msra.mxu0 %v498
  %692 = vmatprep.subr.bf16.mxu0 0
  %693 = vmatpush2.bf16.msra.mxu0 %v513
  %694 = vmatprep.subr.bf16.mxu0 0
  %695 = vmatpush2.bf16.msra.mxu0 %v512
  %696 = vmatprep.subr.bf16.mxu0 0
  %697 = vmatpush2.bf16.msra.mxu0 %v511
  %698 = vmatprep.subr.bf16.mxu0 0
  %699 = vmatpush2.bf16.msra.mxu0 %v510
  %700 = vmatprep.subr.bf16.mxu0 0
  %701 = vmatpush2.bf16.msra.mxu0 %v509
  %702 = vmatprep.subr.bf16.mxu0 0
  %703 = vmatpush2.bf16.msra.mxu0 %v508
  %704 = vmatprep.subr.bf16.mxu0 0
  %705 = vmatpush2.bf16.msra.mxu0 %v507
  %706 = vmatprep.subr.bf16.mxu0 0
  %707 = vmatpush2.bf16.msra.mxu0 %v506
  %708 = vmatprep.mubr.bf16.mxu0 %v199
  %709 = vmatmul.mubr.bf16.gmra.mxu0 %v198
  %v710 = vpop.f32.mrf.mxu0
  %v711 = vadd.f32 %v670, %v710
  %v712 = vpop.f32.mrf.mxu0
  %v713 = vpop.f32.mrf.mxu0
  %v714 = vadd.f32 %v673, %v713
  %v715 = vpop.f32.mrf.mxu0
  %716 = vdwg.mxu0
  %717 = vmatprep.subr.bf16.mxu0 0
  %718 = vmatpush1.bf16.msra.mxu0 %v521
  %719 = vmatprep.subr.bf16.mxu0 0
  %720 = vmatpush1.bf16.msra.mxu0 %v520
  %721 = vmatprep.subr.bf16.mxu0 0
  %722 = vmatpush1.bf16.msra.mxu0 %v519
  %723 = vmatprep.subr.bf16.mxu0 0
  %724 = vmatpush1.bf16.msra.mxu0 %v518
  %725 = vmatprep.subr.bf16.mxu0 0
  %726 = vmatpush1.bf16.msra.mxu0 %v517
  %727 = vmatprep.subr.bf16.mxu0 0
  %728 = vmatpush1.bf16.msra.mxu0 %v516
  %729 = vmatprep.subr.bf16.mxu0 0
  %730 = vmatpush1.bf16.msra.mxu0 %v515
  %731 = vmatprep.subr.bf16.mxu0 0
  %732 = vmatpush1.bf16.msra.mxu0 %v514
  %733 = vmatprep.subr.bf16.mxu0 0
  %734 = vmatpush2.bf16.msra.mxu0 %v529
  %735 = vmatprep.subr.bf16.mxu0 0
  %736 = vmatpush2.bf16.msra.mxu0 %v528
  %737 = vmatprep.subr.bf16.mxu0 0
  %738 = vmatpush2.bf16.msra.mxu0 %v527
  %739 = vmatprep.subr.bf16.mxu0 0
  %740 = vmatpush2.bf16.msra.mxu0 %v526
  %741 = vmatprep.subr.bf16.mxu0 0
  %742 = vmatpush2.bf16.msra.mxu0 %v525
  %743 = vmatprep.subr.bf16.mxu0 0
  %744 = vmatpush2.bf16.msra.mxu0 %v524
  %745 = vmatprep.subr.bf16.mxu0 0
  %746 = vmatpush2.bf16.msra.mxu0 %v523
  %747 = vmatprep.subr.bf16.mxu0 0
  %748 = vmatpush2.bf16.msra.mxu0 %v522
  %749 = vmatprep.mubr.bf16.mxu0 %v201
  %750 = vmatmul.mubr.bf16.gmra.mxu0 %v200
  %v751 = vpop.f32.mrf.mxu0
  %v752 = vadd.f32 %v711, %v751
  %v753 = vpop.f32.mrf.mxu0
  %v754 = vpop.f32.mrf.mxu0
  %v755 = vadd.f32 %v714, %v754
  %v756 = vpop.f32.mrf.mxu0
  %757 = vdwg.mxu0
  %v758 = vmax.f32 %v752, 0.0
  %v759 = vmax.f32 %v755, 0.0
  %v760 = vld [vmem:[%s3] sm:$0xff]
  %v761 = vld [vmem:[%s3 + $0x8] sm:$0xff]
  %v762 = vld [vmem:[%s3 + $0x10] sm:$0xff]
  %v763 = vld [vmem:[%s3 + $0x18] sm:$0xff]
  %v764 = vld [vmem:[%s3 + $0x20] sm:$0xff]
  %v765 = vld [vmem:[%s3 + $0x28] sm:$0xff]
  %v766 = vld [vmem:[%s3 + $0x30] sm:$0xff]
  %v767 = vld [vmem:[%s3 + $0x38] sm:$0xff]
  %v768 = vld [vmem:[%s3 + $0x40] sm:$0xff]
  %v769 = vld [vmem:[%s3 + $0x48] sm:$0xff]
  %v770 = vld [vmem:[%s3 + $0x50] sm:$0xff]
  %v771 = vld [vmem:[%s3 + $0x58] sm:$0xff]
  %v772 = vld [vmem:[%s3 + $0x60] sm:$0xff]
  %v773 = vld [vmem:[%s3 + $0x68] sm:$0xff]
  %v774 = vld [vmem:[%s3 + $0x70] sm:$0xff]
  %v775 = vld [vmem:[%s3 + $0x78] sm:$0xff]
  %v776 = vld [vmem:[%s4] sm:$0x1]
  %v778 = vlaneseq
  %v779 = vshrl.u32 %v778, 7
  %v780 = vsub.s32 0, %v779
  %v781 = vrot.slane %v776, %v780
  %783 = vmatprep.subr.mxu0 0.0
  %784 = vmatpush1.msra.mxu0 %v775
  %785 = vmatprep.subr.mxu0 0.0
  %786 = vmatpush1.msra.mxu0 %v774
  %787 = vmatprep.subr.mxu0 0.0
  %788 = vmatpush1.msra.mxu0 %v773
  %789 = vmatprep.subr.mxu0 0.0
  %790 = vmatpush1.msra.mxu0 %v772
  %791 = vmatprep.subr.mxu0 0.0
  %792 = vmatpush1.msra.mxu0 %v771
  %793 = vmatprep.subr.mxu0 0.0
  %794 = vmatpush1.msra.mxu0 %v770
  %795 = vmatprep.subr.mxu0 0.0
  %796 = vmatpush1.msra.mxu0 %v769
  %797 = vmatprep.subr.mxu0 0.0
  %798 = vmatpush1.msra.mxu0 %v768
  %799 = vmatprep.subr.mxu0 0.0
  %800 = vmatpush1.msra.mxu0 %v767
  %801 = vmatprep.subr.mxu0 0.0
  %802 = vmatpush1.msra.mxu0 %v766
  %803 = vmatprep.subr.mxu0 0.0
  %804 = vmatpush1.msra.mxu0 %v765
  %805 = vmatprep.subr.mxu0 0.0
  %806 = vmatpush1.msra.mxu0 %v764
  %807 = vmatprep.subr.mxu0 0.0
  %808 = vmatpush1.msra.mxu0 %v763
  %809 = vmatprep.subr.mxu0 0.0
  %810 = vmatpush1.msra.mxu0 %v762
  %811 = vmatprep.subr.mxu0 0.0
  %812 = vmatpush1.msra.mxu0 %v761
  %813 = vmatprep.subr.mxu0 0.0
  %814 = vmatpush1.msra.mxu0 %v760
  %815 = vmatprep.subr.mxu0 0.0
  %816 = vmatpush2.msra.mxu0 0.0
  %817 = vmatprep.subr.mxu0 0.0
  %818 = vmatpush2.msra.mxu0 0.0
  %819 = vmatprep.subr.mxu0 0.0
  %820 = vmatpush2.msra.mxu0 0.0
  %821 = vmatprep.subr.mxu0 0.0
  %822 = vmatpush2.msra.mxu0 0.0
  %823 = vmatprep.subr.mxu0 0.0
  %824 = vmatpush2.msra.mxu0 0.0
  %825 = vmatprep.subr.mxu0 0.0
  %826 = vmatpush2.msra.mxu0 0.0
  %827 = vmatprep.subr.mxu0 0.0
  %828 = vmatpush2.msra.mxu0 0.0
  %829 = vmatprep.subr.mxu0 0.0
  %830 = vmatpush2.msra.mxu0 0.0
  %831 = vmatprep.subr.mxu0 0.0
  %832 = vmatpush2.msra.mxu0 0.0
  %833 = vmatprep.subr.mxu0 0.0
  %834 = vmatpush2.msra.mxu0 0.0
  %835 = vmatprep.subr.mxu0 0.0
  %836 = vmatpush2.msra.mxu0 0.0
  %837 = vmatprep.subr.mxu0 0.0
  %838 = vmatpush2.msra.mxu0 0.0
  %839 = vmatprep.subr.mxu0 0.0
  %840 = vmatpush2.msra.mxu0 0.0
  %841 = vmatprep.subr.mxu0 0.0
  %842 = vmatpush2.msra.mxu0 0.0
  %843 = vmatprep.subr.mxu0 0.0
  %844 = vmatpush2.msra.mxu0 0.0
  %845 = vmatprep.subr.mxu0 0.0
  %846 = vmatpush2.msra.mxu0 0.0
  %847 = vmatprep.mubr.f32.mxu0 0.0
  %848 = vmatmul.mubr.f32.gmra.mxu0 %v758
  %v849 = vpop.f32.mrf.mxu0
  %v850 = vadd.f32 %v781, %v849
  %v851 = vpop.f32.mrf.mxu0
  %852 = vmatprep.mubr.f32.mxu0 0.0
  %853 = vmatmul.mubr.f32.gmra.mxu0 %v759
  %v854 = vpop.f32.mrf.mxu0
  %v855 = vadd.f32 %v781, %v854
  %v856 = vpop.f32.mrf.mxu0
  %857 = vdwg.mxu0
  %v858 = vmax.f32 %v850, 0.0
  %v859 = vmax.f32 %v855, 0.0
  %v860 = vld [vmem:[%s5] sm:$0xff]
  %v861 = vld [vmem:[%s5 + $0x8] sm:$0xff]
  %v862 = vld [vmem:[%s5 + $0x10] sm:$0xff]
  %v863 = vld [vmem:[%s5 + $0x18] sm:$0xff]
  %v864 = vld [vmem:[%s5 + $0x20] sm:$0xff]
  %v865 = vld [vmem:[%s5 + $0x28] sm:$0xff]
  %v866 = vld [vmem:[%s5 + $0x30] sm:$0xff]
  %v867 = vld [vmem:[%s5 + $0x38] sm:$0xff]
  %v868 = vld [vmem:[%s5 + $0x40] sm:$0xff]
  %v869 = vld [vmem:[%s5 + $0x48] sm:$0xff]
  %v870 = vld [vmem:[%s5 + $0x50] sm:$0xff]
  %v871 = vld [vmem:[%s5 + $0x58] sm:$0xff]
  %v872 = vld [vmem:[%s5 + $0x60] sm:$0xff]
  %v873 = vld [vmem:[%s5 + $0x68] sm:$0xff]
  %v874 = vld [vmem:[%s5 + $0x70] sm:$0xff]
  %v875 = vld [vmem:[%s5 + $0x78] sm:$0xff]
  %v876 = vld [vmem:[%s6] sm:$0x1]
  %v878 = vlaneseq
  %v879 = vshrl.u32 %v878, 7
  %v880 = vsub.s32 0, %v879
  %v881 = vrot.slane %v876, %v880
  %883 = vmatprep.subr.mxu0 0.0
  %884 = vmatpush1.msra.mxu0 %v875
  %885 = vmatprep.subr.mxu0 0.0
  %886 = vmatpush1.msra.mxu0 %v874
  %887 = vmatprep.subr.mxu0 0.0
  %888 = vmatpush1.msra.mxu0 %v873
  %889 = vmatprep.subr.mxu0 0.0
  %890 = vmatpush1.msra.mxu0 %v872
  %891 = vmatprep.subr.mxu0 0.0
  %892 = vmatpush1.msra.mxu0 %v871
  %893 = vmatprep.subr.mxu0 0.0
  %894 = vmatpush1.msra.mxu0 %v870
  %895 = vmatprep.subr.mxu0 0.0
  %896 = vmatpush1.msra.mxu0 %v869
  %897 = vmatprep.subr.mxu0 0.0
  %898 = vmatpush1.msra.mxu0 %v868
  %899 = vmatprep.subr.mxu0 0.0
  %900 = vmatpush1.msra.mxu0 %v867
  %901 = vmatprep.subr.mxu0 0.0
  %902 = vmatpush1.msra.mxu0 %v866
  %903 = vmatprep.subr.mxu0 0.0
  %904 = vmatpush1.msra.mxu0 %v865
  %905 = vmatprep.subr.mxu0 0.0
  %906 = vmatpush1.msra.mxu0 %v864
  %907 = vmatprep.subr.mxu0 0.0
  %908 = vmatpush1.msra.mxu0 %v863
  %909 = vmatprep.subr.mxu0 0.0
  %910 = vmatpush1.msra.mxu0 %v862
  %911 = vmatprep.subr.mxu0 0.0
  %912 = vmatpush1.msra.mxu0 %v861
  %913 = vmatprep.subr.mxu0 0.0
  %914 = vmatpush1.msra.mxu0 %v860
  %915 = vmatprep.subr.mxu0 0.0
  %916 = vmatpush2.msra.mxu0 0.0
  %917 = vmatprep.subr.mxu0 0.0
  %918 = vmatpush2.msra.mxu0 0.0
  %919 = vmatprep.subr.mxu0 0.0
  %920 = vmatpush2.msra.mxu0 0.0
  %921 = vmatprep.subr.mxu0 0.0
  %922 = vmatpush2.msra.mxu0 0.0
  %923 = vmatprep.subr.mxu0 0.0
  %924 = vmatpush2.msra.mxu0 0.0
  %925 = vmatprep.subr.mxu0 0.0
  %926 = vmatpush2.msra.mxu0 0.0
  %927 = vmatprep.subr.mxu0 0.0
  %928 = vmatpush2.msra.mxu0 0.0
  %929 = vmatprep.subr.mxu0 0.0
  %930 = vmatpush2.msra.mxu0 0.0
  %931 = vmatprep.subr.mxu0 0.0
  %932 = vmatpush2.msra.mxu0 0.0
  %933 = vmatprep.subr.mxu0 0.0
  %934 = vmatpush2.msra.mxu0 0.0
  %935 = vmatprep.subr.mxu0 0.0
  %936 = vmatpush2.msra.mxu0 0.0
  %937 = vmatprep.subr.mxu0 0.0
  %938 = vmatpush2.msra.mxu0 0.0
  %939 = vmatprep.subr.mxu0 0.0
  %940 = vmatpush2.msra.mxu0 0.0
  %941 = vmatprep.subr.mxu0 0.0
  %942 = vmatpush2.msra.mxu0 0.0
  %943 = vmatprep.subr.mxu0 0.0
  %944 = vmatpush2.msra.mxu0 0.0
  %945 = vmatprep.subr.mxu0 0.0
  %946 = vmatpush2.msra.mxu0 0.0
  %947 = vmatprep.mubr.f32.mxu0 0.0
  %948 = vmatmul.mubr.f32.gmra.mxu0 %v858
  %v949 = vpop.f32.mrf.mxu0
  %v950 = vadd.f32 %v881, %v949
  %v951 = vpop.f32.mrf.mxu0
  %952 = vmatprep.mubr.f32.mxu0 0.0
  %953 = vmatmul.mubr.f32.gmra.mxu0 %v859
  %v954 = vpop.f32.mrf.mxu0
  %v955 = vadd.f32 %v881, %v954
  %v956 = vpop.f32.mrf.mxu0
  %957 = vdwg.mxu0
  %958 = vst [vmem:[%s7] sm:$0xff] %v950
  %959 = vst [vmem:[%s7 + $0x8] sm:$0xff] %v955
  // Predicated region
  $region30: #{meta_cl_mlp_forward.1} parent=0 // pred_check
    _
  $region31: #{meta_cl_mlp_forward.1} parent=0 // pred_check_branch
    %961 = sbr.rel (0) target = $region33
  $region32: #{meta_cl_mlp_forward.1} parent=0 // pred_region
    _
  $region33: #{meta_cl_mlp_forward.1} parent=0 // pred_fallthru
    _
  // Predicated region
  $region34: #{meta_cl_mlp_forward.1} parent=0 // pred_check
    _
  $region35: #{meta_cl_mlp_forward.1} parent=0 // pred_check_branch
    %963 = sbr.rel (0) target = $region37
  $region36: #{meta_cl_mlp_forward.1} parent=0 // pred_region
    _
  $region37: #{meta_cl_mlp_forward.1} parent=0 // pred_fallthru
    _

</llo_original>
